<compile_context>
chip_gen: v6e
topology: v6e:2x2x1
jax: 0.10.0
libtpu: 0.0.40
codegen_flags: <defaults>
</compile_context>

<pallas_src>
import jax
import jax.numpy as jnp
import numpy as np
from jax.experimental import pallas as pl
from jax.experimental.pallas import tpu as pltpu


# ----------------------------------------------------------------------------
# Shared in-kernel head for ONE batch element.
#   hidden_ref : (1, S, H) bf16/f32  -- native encoder layout, H lane-dense
#   w_ref      : (H, 2)    same dtype as hidden (nn.Linear weight, transposed)
#   b_ref      : (1, 2)    f32
# returns (2, S) f32 logits (row 0 = start, row 1 = end), S lane-dense.
# ----------------------------------------------------------------------------
def _head_logits_cs(hidden_ref, w_ref, b_ref):
    h = hidden_ref[0]                                            # (S, H)
    # Single un-batched MXU contraction over H, f32 accumulation.
    logits_s2 = jnp.dot(h, w_ref[...],
                        preferred_element_type=jnp.float32)      # (S, 2) f32
    logits_s2 = logits_s2 + b_ref[...]                           # broadcast bias add
    # Tiny (S, 2) -> (2, S) transpose (XLU) so S sits on the lane axis.
    return jnp.transpose(logits_s2)                              # (2, S) f32


# ----------------------------------------------------------------------------
# Train kernel: per-example CE stats accumulated across the batch grid axis,
# loss finalized at the last grid step.
#   tgt_ref  : (2B,) int32 in SMEM, layout [s0, e0, s1, e1, ...]
#   loss_ref : (1, 1) f32 output (same block for every grid step)
#   num_acc / cnt_acc : (2, 1) f32 VMEM scratch (per-class numerator / count)
# ----------------------------------------------------------------------------
def qa_train_kernel(tgt_ref, hidden_ref, w_ref, b_ref, loss_ref, num_acc, cnt_acc):
    b = pl.program_id(0)

    @pl.when(b == 0)
    def _():
        num_acc[...] = jnp.zeros_like(num_acc)
        cnt_acc[...] = jnp.zeros_like(cnt_acc)

    logits = _head_logits_cs(hidden_ref, w_ref, b_ref)           # (2, S) f32

    # Per-class targets for this example from two SMEM scalars.
    t_start = tgt_ref[2 * b]
    t_end = tgt_ref[2 * b + 1]
    cls = jax.lax.broadcasted_iota(jnp.int32, (2, 1), 0)         # tiny (2,1) select
    tgt = jnp.where(cls == 0, t_start, t_end)                    # (2, 1) int32
    valid = (tgt != -1).astype(jnp.float32)                      # (2, 1)

    m = jnp.max(logits, axis=-1, keepdims=True)                  # (2, 1)
    lse = m + jnp.log(jnp.sum(jnp.exp(logits - m), axis=-1, keepdims=True))
    pos = jax.lax.broadcasted_iota(jnp.int32, logits.shape, 1)   # (2, S)
    picked = jnp.sum(jnp.where(pos == tgt, logits, 0.0),
                     axis=-1, keepdims=True)                     # (2, 1)

    num_acc[...] += (lse - picked) * valid
    cnt_acc[...] += valid

    @pl.when(b == pl.num_programs(0) - 1)
    def _():
        # Direct divide: 0/0 -> NaN if every target of a class is -1,
        # matching torch CrossEntropyLoss(ignore_index=-1) behavior.
        per_class = num_acc[...] / cnt_acc[...]                  # (2, 1)
        loss_ref[...] = jnp.sum(per_class, axis=0, keepdims=True) * 0.5


# ----------------------------------------------------------------------------
# Eval kernel: head + softmax over the sequence axis, two lane-dense outputs.
#   start_ref / end_ref : (1, 1, S) f32 blocks.
# ----------------------------------------------------------------------------
def qa_eval_kernel(hidden_ref, w_ref, b_ref, start_ref, end_ref):
    logits = _head_logits_cs(hidden_ref, w_ref, b_ref)           # (2, S) f32
    m = jnp.max(logits, axis=-1, keepdims=True)
    e = jnp.exp(logits - m)
    denom = jnp.sum(e, axis=-1, keepdims=True)
    probs = e * pl.reciprocal(denom, approx=False)               # exact EUP recip
    start_ref[0] = probs[0:1, :]
    end_ref[0] = probs[1:2, :]


# ----------------------------------------------------------------------------
# Wrapper (Pallas equivalent of Model.forward post-pretrained part)
# ----------------------------------------------------------------------------
def model_forward(hidden, targets, qa_w, qa_b, eval=False):
    """hidden : (B, S, H) bf16/f32 encoder output
    targets: (B, 2) int32 (start_position, end_position), -1 = ignore
    qa_w   : (2, H) f32 nn.Linear(H, 2) weight
    qa_b   : (2,)   f32 nn.Linear(H, 2) bias
    """
    B, S, H = hidden.shape
    # Tiny (2, H) -> (H, 2) weight relayout + dtype match for the MXU; 2*H
    # elements, negligible vs. hidden (and removes any large-tensor transpose).
    w_t = qa_w.T.astype(hidden.dtype)
    b2 = qa_b.astype(jnp.float32).reshape(1, 2)

    hidden_spec = pl.BlockSpec((1, S, H), lambda b: (b, 0, 0))
    vmem_whole = pl.BlockSpec(memory_space=pltpu.MemorySpace.VMEM)

    if eval:
        start_p, end_p = pl.pallas_call(
            qa_eval_kernel,
            out_shape=(jax.ShapeDtypeStruct((B, 1, S), jnp.float32),
                       jax.ShapeDtypeStruct((B, 1, S), jnp.float32)),
            grid=(B,),
            in_specs=[hidden_spec, vmem_whole, vmem_whole],
            out_specs=(pl.BlockSpec((1, 1, S), lambda b: (b, 0, 0)),
                       pl.BlockSpec((1, 1, S), lambda b: (b, 0, 0))),
            compiler_params=pltpu.CompilerParams(
                dimension_semantics=("parallel",)),
        )(hidden, w_t, b2)
        # Contiguous (B,1,S)->(B,S) reshape: metadata-only, no strided copy.
        return start_p.reshape(B, S), end_p.reshape(B, S)

    tgt_flat = targets.astype(jnp.int32).reshape(-1)             # (2B,) -> SMEM
    loss = pl.pallas_call(
        qa_train_kernel,
        out_shape=jax.ShapeDtypeStruct((1, 1), jnp.float32),
        grid=(B,),
        in_specs=[pl.BlockSpec(memory_space=pltpu.MemorySpace.SMEM),
                  hidden_spec, vmem_whole, vmem_whole],
        out_specs=pl.BlockSpec((1, 1), lambda b: (0, 0)),
        scratch_shapes=[pltpu.VMEM((2, 1), jnp.float32),
                        pltpu.VMEM((2, 1), jnp.float32)],
        compiler_params=pltpu.CompilerParams(
            dimension_semantics=("arbitrary",)),                 # batch accumulator
    )(tgt_flat, hidden, w_t, b2)
    return loss[0, 0]


model_forward_jit = jax.jit(model_forward, static_argnames=("eval",))


# ----------------------------------------------------------------------------
# Reference (plain JAX) for correctness sanity check
# ----------------------------------------------------------------------------
def _reference(hidden, targets, qa_w, qa_b):
    h = hidden.astype(jnp.float32)
    w = qa_w.astype(hidden.dtype).astype(jnp.float32)
    logits = jnp.einsum("bsh,ch->bsc", h, w) + qa_b.astype(jnp.float32)
    start_logits, end_logits = logits[..., 0], logits[..., 1]

    def ce(lg, tg):
        lse = jax.scipy.special.logsumexp(lg, axis=-1)
        picked = jnp.take_along_axis(lg, jnp.maximum(tg, 0)[:, None], axis=-1)[:, 0]
        valid = (tg != -1).astype(jnp.float32)
        return jnp.sum((lse - picked) * valid) / jnp.sum(valid)

    loss = (ce(start_logits, targets[:, 0]) + ce(end_logits, targets[:, 1])) * 0.5
    return loss, jax.nn.softmax(start_logits, -1), jax.nn.softmax(end_logits, -1)


if __name__ == "__main__":
    B, S, H = 2, 128, 32   # batch, seq (maxlen-like), hidden_size

    key = jax.random.PRNGKey(0)
    k_h, k_w, k_b, k_t = jax.random.split(key, 4)

    # Synthetic pretrained encoder output hidden states (bf16 encoder dtype).
    hidden = jax.random.normal(k_h, (B, S, H), dtype=jnp.float32).astype(jnp.bfloat16)
    # qa_classifier = nn.Linear(H, 2): weight (2, H), bias (2,).
    qa_w = jax.random.normal(k_w, (2, H), dtype=jnp.float32) * 0.05
    qa_b = jax.random.normal(k_b, (2,), dtype=jnp.float32) * 0.01
    # targets (B, 2) = (start_position, end_position); one ignored (-1) entry.
    targets = jax.random.randint(k_t, (B, 2), 0, S, dtype=jnp.int32)
    targets = targets.at[1, 1].set(-1)

    # Train path: scalar loss (single fused kernel, batch-gridded).
    loss = model_forward_jit(hidden, targets, qa_w, qa_b, eval=False)
    loss = jax.block_until_ready(loss)

    # Eval path: softmax over the sequence dimension (single fused kernel).
    start_probs, end_probs = model_forward_jit(hidden, targets, qa_w, qa_b, eval=True)
    jax.block_until_ready((start_probs, end_probs))

    # Sanity check against plain-JAX reference (same bf16-rounded inputs).
    ref_loss, ref_sp, ref_ep = _reference(hidden, targets, qa_w, qa_b)
    assert np.allclose(np.asarray(loss), np.asarray(ref_loss), rtol=2e-3, atol=1e-4), \
        (float(loss), float(ref_loss))
    assert np.allclose(np.asarray(start_probs), np.asarray(ref_sp), rtol=2e-3, atol=1e-4)
    assert np.allclose(np.asarray(end_probs), np.asarray(ref_ep), rtol=2e-3, atol=1e-4)
    assert np.allclose(np.asarray(start_probs).sum(-1), 1.0, rtol=1e-3, atol=1e-3)
    assert np.allclose(np.asarray(end_probs).sum(-1), 1.0, rtol=1e-3, atol=1e-3)

    print("KERNEL_OK")
</pallas_src>

<mosaic_0001>
module attributes {stable_mosaic.version = 11 : i64} {
  func.func @qa_train_kernel(%arg0: i32, %arg1: memref<4xi32, #tpu.memory_space<smem>>, %arg2: memref<1x128x32xbf16, #tpu.memory_space<vmem>>, %arg3: memref<32x2xbf16, #tpu.memory_space<vmem>>, %arg4: memref<1x2xf32, #tpu.memory_space<vmem>>, %arg5: memref<1x1xf32, #tpu.memory_space<vmem>>, %arg6: memref<2x1xf32, #tpu.memory_space<vmem>>, %arg7: memref<2x1xf32, #tpu.memory_space<vmem>>) attributes {dimension_semantics = [#tpu.dimension_semantics<arbitrary>], iteration_bounds = array<i64: 2>, scalar_prefetch = 0 : i64, scratch_operands = 2 : i64, tpu.core_type = #tpu.core_type<tc>, window_params = [{transform_indices = @transform_0, window_bounds = array<i64: 4>}, {transform_indices = @transform_1, window_bounds = array<i64: 1, 128, 32>}, {pipeline_mode = #tpu.pipeline_mode<synchronous>, transform_indices = @transform_2, window_bounds = array<i64: 32, 2>}, {pipeline_mode = #tpu.pipeline_mode<synchronous>, transform_indices = @transform_3, window_bounds = array<i64: 1, 2>}, {pipeline_mode = #tpu.pipeline_mode<synchronous>, transform_indices = @transform_4, window_bounds = array<i64: 1, 1>}]} {
    %c0_i32 = arith.constant 0 : i32
    %0 = arith.cmpi eq, %arg0, %c0_i32 : i32
    %1 = arith.extui %0 : i1 to i32
    %c0_i32_0 = arith.constant 0 : i32
    %2 = arith.cmpi ne, %1, %c0_i32_0 : i32
    scf.if %2 {
      %cst_23 = arith.constant 0.000000e+00 : f32
      %55 = vector.broadcast %cst_23 : f32 to vector<2x1xf32>
      %c0_24 = arith.constant 0 : index
      %c0_25 = arith.constant 0 : index
      %56 = vector.load %arg6[%c0_24, %c0_25] : memref<2x1xf32, #tpu.memory_space<vmem>>, vector<2x1xf32>
      tpu.vector_store %arg6[%c0_24, %c0_25], %55 {strides = array<i32>} : memref<2x1xf32, #tpu.memory_space<vmem>>, vector<2x1xf32>,
      %cst_26 = arith.constant 0.000000e+00 : f32
      %57 = vector.broadcast %cst_26 : f32 to vector<2x1xf32>
      %c0_27 = arith.constant 0 : index
      %c0_28 = arith.constant 0 : index
      %58 = vector.load %arg7[%c0_27, %c0_28] : memref<2x1xf32, #tpu.memory_space<vmem>>, vector<2x1xf32>
      tpu.vector_store %arg7[%c0_27, %c0_28], %57 {strides = array<i32>} : memref<2x1xf32, #tpu.memory_space<vmem>>, vector<2x1xf32>,
    } else {
    }
    %c0 = arith.constant 0 : index
    %c0_1 = arith.constant 0 : index
    %c0_2 = arith.constant 0 : index
    %3 = vector.load %arg2[%c0, %c0_1, %c0_2] : memref<1x128x32xbf16, #tpu.memory_space<vmem>>, vector<1x128x32xbf16>
    %4 = vector.shape_cast %3 : vector<1x128x32xbf16> to vector<128x32xbf16>
    %c0_3 = arith.constant 0 : index
    %c0_4 = arith.constant 0 : index
    %5 = vector.load %arg3[%c0_3, %c0_4] : memref<32x2xbf16, #tpu.memory_space<vmem>>, vector<32x2xbf16>
    %cst = arith.constant dense<0.000000e+00> : vector<128x2xf32>
    %6 = tpu.matmul %4, %5, %cst {dimension_numbers = #tpu.dot_dimension_numbers<[1], [0], [0], [1], [0, 0, 1, 1], [], []>} : vector<128x32xbf16>, vector<32x2xbf16>, vector<128x2xf32> -> vector<128x2xf32>
    %c0_5 = arith.constant 0 : index
    %c0_6 = arith.constant 0 : index
    %7 = vector.load %arg4[%c0_5, %c0_6] : memref<1x2xf32, #tpu.memory_space<vmem>>, vector<1x2xf32>
    %8 = vector.broadcast %7 : vector<1x2xf32> to vector<128x2xf32>
    %9 = arith.addf %6, %8 : vector<128x2xf32>
    %10 = tpu.transpose %9, [1, 0] : vector<128x2xf32> -> vector<2x128xf32>
    %c2_i32 = arith.constant 2 : i32
    %11 = arith.muli %c2_i32, %arg0 : i32
    %12 = arith.index_cast %11 : i32 to index
    %13 = memref.load %arg1[%12] : memref<4xi32, #tpu.memory_space<smem>>
    %c2_i32_7 = arith.constant 2 : i32
    %14 = arith.muli %c2_i32_7, %arg0 : i32
    %c1_i32 = arith.constant 1 : i32
    %15 = arith.addi %14, %c1_i32 : i32
    %16 = arith.index_cast %15 : i32 to index
    %17 = memref.load %arg1[%16] : memref<4xi32, #tpu.memory_space<smem>>
    %18 = tpu.iota {dimensions = array<i32: 0>} : vector<2x1xi32>
    %c0_i32_8 = arith.constant 0 : i32
    %19 = vector.broadcast %c0_i32_8 : i32 to vector<2x1xi32>
    %20 = arith.cmpi eq, %18, %19 : vector<2x1xi32>
    %21 = vector.broadcast %13 : i32 to vector<2x1xi32>
    %22 = vector.broadcast %17 : i32 to vector<2x1xi32>
    %23 = arith.select %20, %21, %22 : vector<2x1xi1>, vector<2x1xi32>
    %c-1_i32 = arith.constant -1 : i32
    %24 = vector.broadcast %c-1_i32 : i32 to vector<2x1xi32>
    %25 = arith.cmpi ne, %23, %24 : vector<2x1xi32>
    %26 = arith.extui %25 : vector<2x1xi1> to vector<2x1xi32>
    %27 = arith.sitofp %26 : vector<2x1xi32> to vector<2x1xf32>
    %cst_9 = arith.constant dense<0xFF800000> : vector<2xf32>
    %28 = vector.multi_reduction <maximumf>, %10, %cst_9 [1] : vector<2x128xf32> to vector<2xf32>
    %29 = vector.shape_cast %28 : vector<2xf32> to vector<2x1xf32>
    %30 = vector.broadcast %29 : vector<2x1xf32> to vector<2x128xf32>
    %31 = arith.subf %10, %30 : vector<2x128xf32>
    %32 = math.exp %31 : vector<2x128xf32>
    %cst_10 = arith.constant dense<0.000000e+00> : vector<2xf32>
    %33 = vector.multi_reduction <add>, %32, %cst_10 [1] : vector<2x128xf32> to vector<2xf32>
    %34 = vector.shape_cast %33 : vector<2xf32> to vector<2x1xf32>
    %35 = math.log %34 : vector<2x1xf32>
    %36 = arith.addf %29, %35 : vector<2x1xf32>
    %37 = tpu.iota {dimensions = array<i32: 1>} : vector<2x128xi32>
    %38 = vector.broadcast %23 : vector<2x1xi32> to vector<2x128xi32>
    %39 = arith.cmpi eq, %37, %38 : vector<2x128xi32>
    %cst_11 = arith.constant 0.000000e+00 : f32
    %40 = vector.broadcast %cst_11 : f32 to vector<2x128xf32>
    %41 = arith.select %39, %10, %40 : vector<2x128xi1>, vector<2x128xf32>
    %cst_12 = arith.constant dense<0.000000e+00> : vector<2xf32>
    %42 = vector.multi_reduction <add>, %41, %cst_12 [1] : vector<2x128xf32> to vector<2xf32>
    %43 = vector.shape_cast %42 : vector<2xf32> to vector<2x1xf32>
    %c0_13 = arith.constant 0 : index
    %c0_14 = arith.constant 0 : index
    %44 = vector.load %arg6[%c0_13, %c0_14] : memref<2x1xf32, #tpu.memory_space<vmem>>, vector<2x1xf32>
    %45 = arith.subf %36, %43 : vector<2x1xf32>
    %46 = arith.mulf %45, %27 : vector<2x1xf32>
    %47 = arith.addf %44, %46 : vector<2x1xf32>
    %c0_15 = arith.constant 0 : index
    %c0_16 = arith.constant 0 : index
    %48 = vector.load %arg6[%c0_15, %c0_16] : memref<2x1xf32, #tpu.memory_space<vmem>>, vector<2x1xf32>
    tpu.vector_store %arg6[%c0_15, %c0_16], %47 {strides = array<i32>} : memref<2x1xf32, #tpu.memory_space<vmem>>, vector<2x1xf32>,
    %c0_17 = arith.constant 0 : index
    %c0_18 = arith.constant 0 : index
    %49 = vector.load %arg7[%c0_17, %c0_18] : memref<2x1xf32, #tpu.memory_space<vmem>>, vector<2x1xf32>
    %50 = arith.addf %49, %27 : vector<2x1xf32>
    %c0_19 = arith.constant 0 : index
    %c0_20 = arith.constant 0 : index
    %51 = vector.load %arg7[%c0_19, %c0_20] : memref<2x1xf32, #tpu.memory_space<vmem>>, vector<2x1xf32>
    tpu.vector_store %arg7[%c0_19, %c0_20], %50 {strides = array<i32>} : memref<2x1xf32, #tpu.memory_space<vmem>>, vector<2x1xf32>,
    %c1_i32_21 = arith.constant 1 : i32
    %52 = arith.cmpi eq, %arg0, %c1_i32_21 : i32
    %53 = arith.extui %52 : i1 to i32
    %c0_i32_22 = arith.constant 0 : i32
    %54 = arith.cmpi ne, %53, %c0_i32_22 : i32
    scf.if %54 {
      %c0_23 = arith.constant 0 : index
      %c0_24 = arith.constant 0 : index
      %55 = vector.load %arg6[%c0_23, %c0_24] : memref<2x1xf32, #tpu.memory_space<vmem>>, vector<2x1xf32>
      %c0_25 = arith.constant 0 : index
      %c0_26 = arith.constant 0 : index
      %56 = vector.load %arg7[%c0_25, %c0_26] : memref<2x1xf32, #tpu.memory_space<vmem>>, vector<2x1xf32>
      %57 = arith.divf %55, %56 : vector<2x1xf32>
      %cst_27 = arith.constant dense<0.000000e+00> : vector<1xf32>
      %58 = vector.multi_reduction <add>, %57, %cst_27 [0] : vector<2x1xf32> to vector<1xf32>
      %59 = vector.shape_cast %58 : vector<1xf32> to vector<1x1xf32>
      %cst_28 = arith.constant 5.000000e-01 : f32
      %60 = vector.broadcast %cst_28 : f32 to vector<1x1xf32>
      %61 = arith.mulf %59, %60 : vector<1x1xf32>
      %c0_29 = arith.constant 0 : index
      %c0_30 = arith.constant 0 : index
      %62 = vector.load %arg5[%c0_29, %c0_30] : memref<1x1xf32, #tpu.memory_space<vmem>>, vector<1x1xf32>
      tpu.vector_store %arg5[%c0_29, %c0_30], %61 {strides = array<i32>} : memref<1x1xf32, #tpu.memory_space<vmem>>, vector<1x1xf32>,
    } else {
    }
    return
  }
  func.func @transform_0(%arg0: i32) -> i32 {
    %c0_i32 = arith.constant 0 : i32
    %c0_i32_0 = arith.constant 0 : i32
    return %c0_i32 : i32
  }
  func.func @transform_1(%arg0: i32) -> (i32, i32, i32) {
    %c0_i32 = arith.constant 0 : i32
    %c0_i32_0 = arith.constant 0 : i32
    %c0_i32_1 = arith.constant 0 : i32
    return %arg0, %c0_i32, %c0_i32_0 : i32, i32, i32
  }
  func.func @transform_2(%arg0: i32) -> (i32, i32) {
    %c0_i32 = arith.constant 0 : i32
    %c0_i32_0 = arith.constant 0 : i32
    %c0_i32_1 = arith.constant 0 : i32
    return %c0_i32, %c0_i32_0 : i32, i32
  }
  func.func @transform_3(%arg0: i32) -> (i32, i32) {
    %c0_i32 = arith.constant 0 : i32
    %c0_i32_0 = arith.constant 0 : i32
    %c0_i32_1 = arith.constant 0 : i32
    return %c0_i32, %c0_i32_0 : i32, i32
  }
  func.func @transform_4(%arg0: i32) -> (i32, i32) {
    %c0_i32 = arith.constant 0 : i32
    %c0_i32_0 = arith.constant 0 : i32
    %c0_i32_1 = arith.constant 0 : i32
    return %c0_i32, %c0_i32_0 : i32, i32
  }
}

</mosaic_0001>

<llo_original>
// kernel: model_forward.1
$region0: #{model_forward.1}
  #allocation0 [shape = 'u32[]', space=smem, size = 0x4, offset = 0x4, fixed_abs, tag = 'smem constant byte address 0x4 - core index']
  #allocation1 [shape = 'u32[144,128]{1,0:T(1,128)}', space=vmem, size = 0x12000, scoped, tag = 'internal scratch']
  #allocation2 [shape = 'f32[2,1]{1,0:T(2,128)}', space=vmem, size = 0x400, scoped, tag = 'scratch operand']
  #allocation3 [shape = 'f32[2,1]{1,0:T(2,128)}', space=vmem, size = 0x400, scoped, tag = 'scratch operand']
  %s0 = inlined_call_operand.vmem [shape: s32[4], index: 0, kind: input, shape index: {}]
  %s1 = inlined_call_operand.vmem [shape: bf16[2,128,32], index: 1, kind: input, shape index: {}]
  %s2 = inlined_call_operand.vmem [shape: bf16[32,2], index: 2, kind: input, shape index: {}]
  %s3 = inlined_call_operand.vmem [shape: f32[1,2], index: 3, kind: input, shape index: {}]
  %s4 = inlined_call_operand.hbm [shape: f32[1,1], index: 4, kind: output, shape index: {}]
  %s5 = sld [smem:[#allocation0]]
  $region61: #{model_forward.1} parent=0
    _
  %s7 = ssub.s32 1, %s5
  %s8 = scalar_select 0, %s7, %s5
  $region1: #{model_forward.1} parent=0
    #allocation4 [shape = 'u8[512]{0}', space=smem, size = 0x200, scoped, tag = 'input window, operand 0, single buffered']
    #allocation5 [shape = 's32[2]{0}', space=sflag, size = 0x8, scoped, tag = 'scoped memory for model_forward.1']
    #allocation6 [shape = 's32[2]{0}', space=sflag, size = 0x8, scoped, tag = 'scoped memory for model_forward.1']
    #allocation7 [shape = 'u8[512]{0}', space=vmem, size = 0x400, scoped, tag = 'output window, operand 0, single buffered']
    %9 = vsyncpa [#allocation6], 0
    %10 = vsyncpa [#allocation5], 0
    loop: start=0, step=1, limit=4
    $region2: #{model_forward.1} parent=1 // loop_pre_header
      _
    $region3: #{model_forward.1} parent=1 // loop_header
      %s12 = sphi 0, %s16
      %p13 = scmp.ge.s32.totalorder %s12, 4
      %s20 = sphi 0, %s20
      %s22 = sphi 0, %s20
      %s23 = sphi 0, %s22
      %s37 = sphi 0, %s23
      %s43 = sphi 0, %s45
      %s46 = sphi 0, %s43
      %s47 = sphi 0, %s46
      %s63 = sphi 0, %s47
      %s67 = sphi 0, %s67
      %s69 = sphi 0, %s67
      %s70 = sphi 0, %s69
      %s84 = sphi 0, %s70
      %s88 = sphi 0, %s88
      %s90 = sphi 0, %s88
      %s91 = sphi 0, %s90
      %s105 = sphi 0, %s91
      %s109 = sphi 0, %s109
      %s111 = sphi 0, %s109
      %s112 = sphi 0, %s111
      %s126 = sphi 0, %s112
    $region4: #{model_forward.1} parent=1 // loop_header_branch
      %15 = sbr.rel (%p13) target = $region8
    $region5: #{model_forward.1} parent=1 // loop_body
      %s17 = ssub.s32 %s12, 1
      %s18 = ssub.s32 %s12, 2
      %s19 = sadd.s32 %s12, 1
      %s21 = sadd.s32 %s20, 1
      %p24 = scmp.eq.s32.totalorder %s12, 1
      %p25 = scmp.ne.s32.totalorder %s20, %s22
      %p26 = scmp.eq.s32.totalorder %s12, 0
      %p27 = por %p25, %p26
      %p28 = scmp.ne.s32.totalorder %s20, %s22
      %p29 = scmp.eq.s32.totalorder %s17, 1
      %p30 = por %p28, %p29
      %p31 = scmp.ne.s32.totalorder %s22, %s23
      %p32 = scmp.eq.s32.totalorder %s17, 0
      %p33 = por %p31, %p32
      %p34 = scmp.ne.s32.totalorder %s22, %s23
      %p35 = scmp.eq.s32.totalorder %s18, 1
      %p36 = por %p34, %p35
      %p38 = scmp.ne.s32.totalorder %s23, %s37
      %p39 = scmp.eq.s32.totalorder %s18, 0
      %p40 = por %p38, %p39
      %s41 = ssub.s32 %s12, %s19
      %p42 = scmp.eq.s32.totalorder %s41, 0
      %s44 = sadd.s32 %s43, 1
      %s45 = scalar_select %p42, %s43, %s44
      %p48 = pneg %p42
      %p49 = scmp.eq.s32.totalorder %s12, 1
      %p50 = por %p48, %p49
      %p51 = scmp.ne.s32.totalorder %s43, %s46
      %p52 = scmp.eq.s32.totalorder %s12, 0
      %p53 = por %p51, %p52
      %p54 = scmp.ne.s32.totalorder %s43, %s46
      %p55 = scmp.eq.s32.totalorder %s17, 1
      %p56 = por %p54, %p55
      %p57 = scmp.ne.s32.totalorder %s46, %s47
      %p58 = scmp.eq.s32.totalorder %s17, 0
      %p59 = por %p57, %p58
      %p60 = scmp.ne.s32.totalorder %s46, %s47
      %p61 = scmp.eq.s32.totalorder %s18, 1
      %p62 = por %p60, %p61
      %p64 = scmp.ne.s32.totalorder %s47, %s63
      %p65 = scmp.eq.s32.totalorder %s18, 0
      %p66 = por %p64, %p65
      %s68 = sadd.s32 %s67, 1
      %p71 = scmp.eq.s32.totalorder %s12, 1
      %p72 = scmp.ne.s32.totalorder %s67, %s69
      %p73 = scmp.eq.s32.totalorder %s12, 0
      %p74 = por %p72, %p73
      %p75 = scmp.ne.s32.totalorder %s67, %s69
      %p76 = scmp.eq.s32.totalorder %s17, 1
      %p77 = por %p75, %p76
      %p78 = scmp.ne.s32.totalorder %s69, %s70
      %p79 = scmp.eq.s32.totalorder %s17, 0
      %p80 = por %p78, %p79
      %p81 = scmp.ne.s32.totalorder %s69, %s70
      %p82 = scmp.eq.s32.totalorder %s18, 1
      %p83 = por %p81, %p82
      %p85 = scmp.ne.s32.totalorder %s70, %s84
      %p86 = scmp.eq.s32.totalorder %s18, 0
      %p87 = por %p85, %p86
      %s89 = sadd.s32 %s88, 1
      %p92 = scmp.eq.s32.totalorder %s12, 1
      %p93 = scmp.ne.s32.totalorder %s88, %s90
      %p94 = scmp.eq.s32.totalorder %s12, 0
      %p95 = por %p93, %p94
      %p96 = scmp.ne.s32.totalorder %s88, %s90
      %p97 = scmp.eq.s32.totalorder %s17, 1
      %p98 = por %p96, %p97
      %p99 = scmp.ne.s32.totalorder %s90, %s91
      %p100 = scmp.eq.s32.totalorder %s17, 0
      %p101 = por %p99, %p100
      %p102 = scmp.ne.s32.totalorder %s90, %s91
      %p103 = scmp.eq.s32.totalorder %s18, 1
      %p104 = por %p102, %p103
      %p106 = scmp.ne.s32.totalorder %s91, %s105
      %p107 = scmp.eq.s32.totalorder %s18, 0
      %p108 = por %p106, %p107
      %s110 = sadd.s32 %s109, 1
      %p113 = scmp.eq.s32.totalorder %s12, 1
      %p114 = scmp.ne.s32.totalorder %s109, %s111
      %p115 = scmp.eq.s32.totalorder %s12, 0
      %p116 = por %p114, %p115
      %p117 = scmp.ne.s32.totalorder %s109, %s111
      %p118 = scmp.eq.s32.totalorder %s17, 1
      %p119 = por %p117, %p118
      %p120 = scmp.ne.s32.totalorder %s111, %s112
      %p121 = scmp.eq.s32.totalorder %s17, 0
      %p122 = por %p120, %p121
      %p123 = scmp.ne.s32.totalorder %s111, %s112
      %p124 = scmp.eq.s32.totalorder %s18, 1
      %p125 = por %p123, %p124
      %p127 = scmp.ne.s32.totalorder %s112, %s126
      %p128 = scmp.eq.s32.totalorder %s18, 0
      %p129 = por %p127, %p128
      %p130 = scmp.le.s32.totalorder 1, %s12
      %p131 = scmp.lt.s32.totalorder %s12, 3
      %p132 = pnand %p130, %p131
      %p133 = pneg %p132
      // Predicated region
      $region9: #{model_forward.1} parent=5 // pred_check
        _
      $region10: #{model_forward.1} parent=5 // pred_check_branch
        %135 = sbr.rel (%p132) target = $region12
      $region11: #{model_forward.1} parent=5 // pred_region
        %s136 = ssub.s32 %s12, 1
        // Predicated region
        $region13: #{model_forward.1} parent=11 // pred_check
          %p137 = pneg %p33
        $region14: #{model_forward.1} parent=11 // pred_check_branch
          %139 = sbr.rel (%p137) target = $region16
        $region15: #{model_forward.1} parent=11 // pred_region
          %s141 = ssub.s32 16, 16
          %142 = vsyncadd [#allocation6], %s141
          %s144 = sshll.u32 %s0, 4
          %s145 = int_to_ptr.vmem [resolvable:$true] %s144
          %147 = dma.vmem_to_smem %s145, 16, [#allocation4], [#allocation6]
        $region16: #{model_forward.1} parent=11 // pred_fallthru
          _
        // Predicated region
        $region17: #{model_forward.1} parent=11 // pred_check
          %p148 = pneg %p80
        $region18: #{model_forward.1} parent=11 // pred_check_branch
          %150 = sbr.rel (%p148) target = $region20
        $region19: #{model_forward.1} parent=11 // pred_region
          _
        $region20: #{model_forward.1} parent=11 // pred_fallthru
          _
        // Predicated region
        $region21: #{model_forward.1} parent=11 // pred_check
          %p151 = pneg %p101
        $region22: #{model_forward.1} parent=11 // pred_check_branch
          %153 = sbr.rel (%p151) target = $region24
        $region23: #{model_forward.1} parent=11 // pred_region
          _
        $region24: #{model_forward.1} parent=11 // pred_fallthru
          _
      $region12: #{model_forward.1} parent=5 // pred_fallthru
        _
      %p154 = scmp.lt.s32.totalorder %s12, 2
      // Predicated region
      $region25: #{model_forward.1} parent=5 // pred_check
        %p155 = pneg %p154
      $region26: #{model_forward.1} parent=5 // pred_check_branch
        %157 = sbr.rel (%p155) target = $region28
      $region27: #{model_forward.1} parent=5 // pred_region
        // Predicated region
        $region29: #{model_forward.1} parent=27 // pred_check
          %p158 = pneg %p53
        $region30: #{model_forward.1} parent=27 // pred_check_branch
          %160 = sbr.rel (%p158) target = $region32
        $region31: #{model_forward.1} parent=27 // pred_region
          %p161 = scmp.lt.s32.totalorder %s12, 1
          %s162 = scalar_select %p161, %s12, 1
          %s163 = smul.addr %s162, 16
          %s164 = smul.addr %s163, 4
          %s165 = scalar_lea.vmem %s1, %s164
        $region32: #{model_forward.1} parent=27 // pred_fallthru
          _
      $region28: #{model_forward.1} parent=5 // pred_fallthru
        _
      %p166 = scmp.le.s32.totalorder 1, %s12
      %p167 = scmp.lt.s32.totalorder %s12, 3
      %p168 = pnand %p166, %p167
      %p169 = pneg %p168
      // Predicated region
      $region33: #{model_forward.1} parent=5 // pred_check
        _
      $region34: #{model_forward.1} parent=5 // pred_check_branch
        %171 = sbr.rel (%p168) target = $region36
      $region35: #{model_forward.1} parent=5 // pred_region
        %s172 = ssub.s32 %s12, 1
        // Predicated region
        $region37: #{model_forward.1} parent=35 // pred_check
          %p173 = pneg %p33
        $region38: #{model_forward.1} parent=35 // pred_check_branch
          %175 = sbr.rel (%p173) target = $region40
        $region39: #{model_forward.1} parent=35 // pred_region
          %176 = dma.done [#allocation6], 16
        $region40: #{model_forward.1} parent=35 // pred_fallthru
          _
        %177 = sfence
        %p178 = pneg %p33
        %p179 = pneg %p30
        %p180 = scmp.lt.s32.totalorder %s17, 1
        %s181 = scalar_select %p180, %s17, 1
        %s182 = smul.addr %s181, 16
        %s183 = smul.addr %s182, 4
        %s184 = scalar_lea.vmem %s1, %s183
        %p185 = pneg %p59
        %p186 = pneg %p56
        %p187 = pneg %p80
        %p188 = pneg %p77
        %p189 = pneg %p101
        %p190 = pneg %p98
        %p191 = pneg %p122
        %p192 = pneg %p119
        %p193 = scmp.lt.s32.totalorder %s17, 1
        %s194 = scalar_select %p193, %s17, 1
        %s195 = smul.addr %s194, 16
        %s196 = smul.addr %s195, 4
        %s197 = scalar_lea.vmem %s1, %s196
        %p199 = scmp.eq.s32.totalorder %s17, 0
        // Predicated region
        $region41: #{model_forward.1} parent=35 // pred_check
          %p200 = pneg %p199
        $region42: #{model_forward.1} parent=35 // pred_check_branch
          %202 = sbr.rel (%p200) target = $region44
        $region43: #{model_forward.1} parent=35 // pred_region
          %vm203 = vcmask 1024
          %204 = vst.msk [vmem:[#allocation2] sm:$0x3] %vm203, 0.0
          %205 = vst.msk [vmem:[#allocation3] sm:$0x3] %vm203, 0.0
        $region44: #{model_forward.1} parent=35 // pred_fallthru
          _
        %v206 = vld [vmem:[%s197] sm:$0xf]
        %v207 = vld [vmem:[%s197 + $0x4] sm:$0xf]
        %v208 = vld [vmem:[%s197 + $0x8] sm:$0xf]
        %v209 = vld [vmem:[%s197 + $0xc] sm:$0xf]
        %v210 = vld [vmem:[%s197 + $0x10] sm:$0xf]
        %v211 = vld [vmem:[%s197 + $0x14] sm:$0xf]
        %v212 = vld [vmem:[%s197 + $0x18] sm:$0xf]
        %v213 = vld [vmem:[%s197 + $0x1c] sm:$0xf]
        %v214 = vld [vmem:[%s197 + $0x20] sm:$0xf]
        %v215 = vld [vmem:[%s197 + $0x24] sm:$0xf]
        %v216 = vld [vmem:[%s197 + $0x28] sm:$0xf]
        %v217 = vld [vmem:[%s197 + $0x2c] sm:$0xf]
        %v218 = vld [vmem:[%s197 + $0x30] sm:$0xf]
        %v219 = vld [vmem:[%s197 + $0x34] sm:$0xf]
        %v220 = vld [vmem:[%s197 + $0x38] sm:$0xf]
        %v221 = vld [vmem:[%s197 + $0x3c] sm:$0xf]
        %v222 = vld [vmem:[%s2] sm:$0xf]
        %v223 = vld [vmem:[%s2 + $0x4] sm:$0xf]
        %v224 = vld [vmem:[%s2 + $0x8] sm:$0xf]
        %v225 = vld [vmem:[%s2 + $0xc] sm:$0xf]
        %v226 = vld [vmem:[%s3] sm:$0x1]
        %v228 = vlaneseq
        %v229 = vshrl.u32 %v228, 7
        %v230 = vsub.s32 0, %v229
        %v231 = vrot.slane %v226, %v230
        %v249 = vunpack.c.l.b16 %v206
        %v250 = vunpack.c.l.b16 %v207
        %v251 = vunpack.c.l.b16 %v208
        %v252 = vunpack.c.l.b16 %v209
        %v253 = vunpack.c.l.b16 %v210
        %v254 = vunpack.c.l.b16 %v211
        %v255 = vunpack.c.l.b16 %v212
        %v256 = vunpack.c.l.b16 %v213
        %v257 = vunpack.c.l.b16 %v214
        %v258 = vunpack.c.l.b16 %v215
        %v259 = vunpack.c.l.b16 %v216
        %v260 = vunpack.c.l.b16 %v217
        %v261 = vunpack.c.l.b16 %v218
        %v262 = vunpack.c.l.b16 %v219
        %v263 = vunpack.c.l.b16 %v220
        %v264 = vunpack.c.l.b16 %v221
        %v265 = vpack.c.b16 %v250, %v249
        %v266 = vpack.c.b16 %v252, %v251
        %v267 = vpack.c.b16 %v254, %v253
        %v268 = vpack.c.b16 %v256, %v255
        %v269 = vpack.c.b16 %v258, %v257
        %v270 = vpack.c.b16 %v260, %v259
        %v271 = vpack.c.b16 %v262, %v261
        %v272 = vpack.c.b16 %v264, %v263
        %v277 = vunpack.c.l.b16 %v222
        %v278 = vunpack.c.l.b16 %v223
        %v279 = vunpack.c.l.b16 %v224
        %v280 = vunpack.c.l.b16 %v225
        %v281 = vpack.c.b16 %v278, %v277
        %v282 = vpack.c.b16 %v280, %v279
        %vm285 = vcmask 261120
        %v287 = vsel %vm285, %v265, 0
        %v290 = vsel %vm285, %v266, 0
        %v293 = vsel %vm285, %v267, 0
        %v296 = vsel %vm285, %v268, 0
        %v299 = vsel %vm285, %v269, 0
        %v302 = vsel %vm285, %v270, 0
        %v305 = vsel %vm285, %v271, 0
        %v308 = vsel %vm285, %v272, 0
        %310 = vmatprep.subr.bf16.mxu0 0
        %311 = vmatpush1.bf16.msra.mxu0 0
        %312 = vmatprep.subr.bf16.mxu0 0
        %313 = vmatpush1.bf16.msra.mxu0 0
        %314 = vmatprep.subr.bf16.mxu0 0
        %315 = vmatpush1.bf16.msra.mxu0 0
        %316 = vmatprep.subr.bf16.mxu0 0
        %317 = vmatpush1.bf16.msra.mxu0 0
        %318 = vmatprep.subr.bf16.mxu0 0
        %319 = vmatpush1.bf16.msra.mxu0 0
        %320 = vmatprep.subr.bf16.mxu0 0
        %321 = vmatpush1.bf16.msra.mxu0 0
        %322 = vmatprep.subr.bf16.mxu0 0
        %323 = vmatpush1.bf16.msra.mxu0 %v282
        %324 = vmatprep.subr.bf16.mxu0 0
        %325 = vmatpush1.bf16.msra.mxu0 %v281
        %326 = vmatprep.subr.bf16.mxu0 0
        %327 = vmatpush2.bf16.msra.mxu0 0
        %328 = vmatprep.subr.bf16.mxu0 0
        %329 = vmatpush2.bf16.msra.mxu0 0
        %330 = vmatprep.subr.bf16.mxu0 0
        %331 = vmatpush2.bf16.msra.mxu0 0
        %332 = vmatprep.subr.bf16.mxu0 0
        %333 = vmatpush2.bf16.msra.mxu0 0
        %334 = vmatprep.subr.bf16.mxu0 0
        %335 = vmatpush2.bf16.msra.mxu0 0
        %336 = vmatprep.subr.bf16.mxu0 0
        %337 = vmatpush2.bf16.msra.mxu0 0
        %338 = vmatprep.subr.bf16.mxu0 0
        %339 = vmatpush2.bf16.msra.mxu0 0
        %340 = vmatprep.subr.bf16.mxu0 0
        %341 = vmatpush2.bf16.msra.mxu0 0
        %342 = vmatprep.mubr.bf16.mxu0 0
        %343 = vmatmul.mubr.bf16.gmra.mxu0 %v287
        %v344 = vpop.f32.mrf.mxu0
        %v345 = vadd.f32 %v231, %v344
        %v346 = vpop.f32.mrf.mxu0
        %v347 = vpop.f32.mrf.mxu0
        %v348 = vadd.f32 %v231, %v347
        %v349 = vpop.f32.mrf.mxu0
        %350 = vmatprep.mubr.bf16.mxu0 0
        %351 = vmatmul.mubr.bf16.gmra.mxu0 %v290
        %v352 = vpop.f32.mrf.mxu0
        %v353 = vadd.f32 %v231, %v352
        %v354 = vpop.f32.mrf.mxu0
        %v355 = vpop.f32.mrf.mxu0
        %v356 = vadd.f32 %v231, %v355
        %v357 = vpop.f32.mrf.mxu0
        %358 = vmatprep.mubr.bf16.mxu0 0
        %359 = vmatmul.mubr.bf16.gmra.mxu0 %v293
        %v360 = vpop.f32.mrf.mxu0
        %v361 = vadd.f32 %v231, %v360
        %v362 = vpop.f32.mrf.mxu0
        %v363 = vpop.f32.mrf.mxu0
        %v364 = vadd.f32 %v231, %v363
        %v365 = vpop.f32.mrf.mxu0
        %366 = vmatprep.mubr.bf16.mxu0 0
        %367 = vmatmul.mubr.bf16.gmra.mxu0 %v296
        %v368 = vpop.f32.mrf.mxu0
        %v369 = vadd.f32 %v231, %v368
        %v370 = vpop.f32.mrf.mxu0
        %v371 = vpop.f32.mrf.mxu0
        %v372 = vadd.f32 %v231, %v371
        %v373 = vpop.f32.mrf.mxu0
        %374 = vmatprep.mubr.bf16.mxu0 0
        %375 = vmatmul.mubr.bf16.gmra.mxu0 %v299
        %v376 = vpop.f32.mrf.mxu0
        %v377 = vadd.f32 %v231, %v376
        %v378 = vpop.f32.mrf.mxu0
        %v379 = vpop.f32.mrf.mxu0
        %v380 = vadd.f32 %v231, %v379
        %v381 = vpop.f32.mrf.mxu0
        %382 = vmatprep.mubr.bf16.mxu0 0
        %383 = vmatmul.mubr.bf16.gmra.mxu0 %v302
        %v384 = vpop.f32.mrf.mxu0
        %v385 = vadd.f32 %v231, %v384
        %v386 = vpop.f32.mrf.mxu0
        %v387 = vpop.f32.mrf.mxu0
        %v388 = vadd.f32 %v231, %v387
        %v389 = vpop.f32.mrf.mxu0
        %390 = vmatprep.mubr.bf16.mxu0 0
        %391 = vmatmul.mubr.bf16.gmra.mxu0 %v305
        %v392 = vpop.f32.mrf.mxu0
        %v393 = vadd.f32 %v231, %v392
        %v394 = vpop.f32.mrf.mxu0
        %v395 = vpop.f32.mrf.mxu0
        %v396 = vadd.f32 %v231, %v395
        %v397 = vpop.f32.mrf.mxu0
        %398 = vmatprep.mubr.bf16.mxu0 0
        %399 = vmatmul.mubr.bf16.gmra.mxu0 %v308
        %v400 = vpop.f32.mrf.mxu0
        %v401 = vadd.f32 %v231, %v400
        %v402 = vpop.f32.mrf.mxu0
        %v403 = vpop.f32.mrf.mxu0
        %v404 = vadd.f32 %v231, %v403
        %v405 = vpop.f32.mrf.mxu0
        %406 = vdwg.mxu0
        %407 = vxpose.xlu0.b32.start [1/16] %v345, 128
        %408 = vxpose.xlu0.b32.cont [2/16] %v348, 128
        %409 = vxpose.xlu0.b32.cont [3/16] %v353, 128
        %410 = vxpose.xlu0.b32.cont [4/16] %v356, 128
        %411 = vxpose.xlu0.b32.cont [5/16] %v361, 128
        %412 = vxpose.xlu0.b32.cont [6/16] %v364, 128
        %413 = vxpose.xlu0.b32.cont [7/16] %v369, 128
        %414 = vxpose.xlu0.b32.cont [8/16] %v372, 128
        %415 = vxpose.xlu0.b32.cont [9/16] %v377, 128
        %416 = vxpose.xlu0.b32.cont [10/16] %v380, 128
        %417 = vxpose.xlu0.b32.cont [11/16] %v385, 128
        %418 = vxpose.xlu0.b32.cont [12/16] %v388, 128
        %419 = vxpose.xlu0.b32.cont [13/16] %v393, 128
        %420 = vxpose.xlu0.b32.cont [14/16] %v396, 128
        %421 = vxpose.xlu0.b32.cont [15/16] %v401, 128
        %422 = vxpose.xlu0.b32.end [16/16] %v404, 128
        %v423 = vpop.trf.xlu0
        %v424 = vpop.trf.xlu0
        %v425 = vpop.trf.xlu0
        %v426 = vpop.trf.xlu0
        %v427 = vpop.trf.xlu0
        %v428 = vpop.trf.xlu0
        %v429 = vpop.trf.xlu0
        %v430 = vpop.trf.xlu0
        %v431 = vpop.trf.xlu0
        %v432 = vpop.trf.xlu0
        %v433 = vpop.trf.xlu0
        %v434 = vpop.trf.xlu0
        %v435 = vpop.trf.xlu0
        %v436 = vpop.trf.xlu0
        %v437 = vpop.trf.xlu0
        %v438 = vpop.trf.xlu0
        %s439 = smul.u32 %s17, 2
        %s440 = sld [smem:[#allocation4 + %s439]]
        %s441 = sadd.s32 %s439, 1
        %s442 = sld [smem:[#allocation4 + %s441]]
        %v443 = vlaneseq
        %v444 = vshrl.u32 %v443, 7
        %vm445 = vcmp.eq.s32.totalorder %v444, 0
        %v446 = vstv %s440
        %v447 = vstv %s442
        %v448 = vsel %vm445, %v446, %v447
        %vm449 = vcmp.ne.s32.totalorder %v448, 4294967295
        %v450 = vsel %vm449, 1, 0
        %v451 = vcvt.s32.f32 %v450
        %vm452 = vcmask 1041408
        %v453 = vsel %vm452, %v423, -inf
        %454 = vmax.xlane.f32.xlu0 %v453
        %v455 = vpop.xlane.xlu0 %454
        %v456 = vsub.f32 %v423, %v455
        %v457 = vmul.f32 %v456, 1.442695
        %v458 = vpow.pop %v457
        %v459 = vsel %vm452, %v458, 0.0
        %460 = vadd.xlane.f32.xlu0 %v459
        %v461 = vpop.xlane.xlu0 %460
        %v462 = vlog2.pop %v461
        %v463 = vmul.f32 %v462, 0.6931472
        %v464 = vadd.f32 %v455, %v463
        %v465 = vlaneseq
        %v466 = vand.u32 %v465, 127
        %vm467 = vcmp.eq.s32.totalorder %v466, %v448
        %v468 = vsel %vm467, %v423, 0.0
        %v469 = vsel %vm452, %v468, 0.0
        %470 = vadd.xlane.f32.xlu0 %v469
        %v471 = vpop.xlane.xlu0 %470
        %v472 = vld [vmem:[#allocation2] sm:$0x3]
        %v473 = vsub.f32 %v464, %v471
        %v474 = vmul.f32 %v473, %v451
        %v475 = vadd.f32 %v472, %v474
        %vm476 = vcmask 1024
        %477 = vst.msk [vmem:[#allocation2] sm:$0x3] %vm476, %v475
        %v478 = vld [vmem:[#allocation3] sm:$0x3]
        %v479 = vadd.f32 %v478, %v451
        %480 = vst.msk [vmem:[#allocation3] sm:$0x3] %vm476, %v479
        %p481 = scmp.eq.s32.totalorder %s17, 1
        // Predicated region
        $region45: #{model_forward.1} parent=35 // pred_check
          %p482 = pneg %p481
        $region46: #{model_forward.1} parent=35 // pred_check_branch
          %484 = sbr.rel (%p482) target = $region48
        $region47: #{model_forward.1} parent=35 // pred_region
          %v485 = vld [vmem:[#allocation2] sm:$0x3]
          %v486 = vld [vmem:[#allocation3] sm:$0x3]
          %v487 = vrcp.pop %v486
          %v488 = vmul.f32 %v485, %v487
          %v489 = vsel %vm476, %v488, 0.0
          %v490 = vrot.slane %v489, 4
          %v491 = vadd.f32 %v489, %v490
          %v492 = vrot.slane %v491, 2
          %v493 = vadd.f32 %v491, %v492
          %v494 = vrot.slane %v493, 1
          %v495 = vadd.f32 %v493, %v494
          %v496 = vmul.f32 %v495, 0.5
          %vm497 = vcmask 0
          %498 = vst.msk [vmem:[#allocation7] sm:$0x1] %vm497, %v496
        $region48: #{model_forward.1} parent=35 // pred_fallthru
          _
        // Predicated region
        $region49: #{model_forward.1} parent=35 // pred_check
          %p499 = pneg %p119
        $region50: #{model_forward.1} parent=35 // pred_check_branch
          %501 = sbr.rel (%p499) target = $region52
        $region51: #{model_forward.1} parent=35 // pred_region
          %s503 = ssub.s32 16, 16
          %504 = vsyncadd [#allocation5], %s503
          %s506 = sshll.u32 [#allocation7], 4
          %s507 = int_to_ptr.vmem [resolvable:$true] %s506
          %509 = dma.vmem_to_hbm [thread:$0]  %s507, 16, %s4, [#allocation5]
        $region52: #{model_forward.1} parent=35 // pred_fallthru
          _
        // Predicated region
        $region53: #{model_forward.1} parent=35 // pred_check
          %p510 = pneg %p119
        $region54: #{model_forward.1} parent=35 // pred_check_branch
          %512 = sbr.rel (%p510) target = $region56
        $region55: #{model_forward.1} parent=35 // pred_region
          %513 = dma.done [#allocation5], 16
        $region56: #{model_forward.1} parent=35 // pred_fallthru
          _
      $region36: #{model_forward.1} parent=5 // pred_fallthru
        _
      %p514 = scmp.le.s32.totalorder 2, %s12
      // Predicated region
      $region57: #{model_forward.1} parent=5 // pred_check
        %p515 = pneg %p514
      $region58: #{model_forward.1} parent=5 // pred_check_branch
        %517 = sbr.rel (%p515) target = $region60
      $region59: #{model_forward.1} parent=5 // pred_region
        %s518 = ssub.s32 %s12, 2
      $region60: #{model_forward.1} parent=5 // pred_fallthru
        _
    $region6: #{model_forward.1} parent=1 // loop_footer
      %s16 = sadd.s32 1, %s12
    $region7: #{model_forward.1} parent=1 // loop_footer_branch
      %11 = sbr.rel target = $region3
    $region8: #{model_forward.1} parent=1 // loop_exit
      _
    %519 = vsyncpa [#allocation5], 1
    %s520 = scalar_lea.sflag [#allocation5], 1
    %521 = vsyncpa %s520, 1
    %522 = vsyncpa [#allocation6], 1
    %s523 = scalar_lea.sflag [#allocation6], 1
    %524 = vsyncpa %s523, 1

</llo_original>
